<compile_context>
chip_gen: v7x
topology: tpu7x:2x2x1
jax: 0.10.0
libtpu: 0.0.40
codegen_flags: <defaults>
</compile_context>

<pallas_src>
import math
import functools

import jax
import jax.numpy as jnp
from jax.experimental import pallas as pl
from jax.experimental.pallas import tpu as pltpu

_VMEM_LIMIT = 48 * 1024 * 1024   # safe on v5e/v6e (128 MiB) and v7x (64 MiB)


def _round_up(x, m):
    return ((x + m - 1) // m) * m


def _cdiv(a, b):
    return -(-a // b)


# --------------------------------------------------------------------------- #
# Pallas kernels
# --------------------------------------------------------------------------- #
def _fc_act_kernel(a_ref, w_ref, b_ref, o_ref, *, slope):
    acc = jnp.dot(a_ref[...], w_ref[...], preferred_element_type=jnp.float32)
    acc = acc + b_ref[...]
    o_ref[...] = jnp.where(acc >= 0, acc, slope * acc)


def _deconv_small_kernel(a_ref, w_ref, b_ref, g_ref, bt_ref, o_ref, *, M, slope, eps):
    """Fused im2col-matmul + bias + BatchNorm(batch stats) + LeakyReLU.

    Whole problem lives in VMEM (single grid step).  Rows >= M are padding and
    are masked out of the statistics.  Variance uses the centered form."""
    acc = jnp.dot(a_ref[...], w_ref[...], preferred_element_type=jnp.float32)
    acc = acc + b_ref[...]                                       # (Mp, C)
    rid = jax.lax.broadcasted_iota(jnp.int32, acc.shape, 0)
    valid = rid < M
    cnt = float(M)
    mean = jnp.sum(jnp.where(valid, acc, 0.0), axis=0, keepdims=True) / cnt
    cent = acc - mean
    var = jnp.sum(jnp.where(valid, cent * cent, 0.0), axis=0, keepdims=True) / cnt
    inv = jax.lax.rsqrt(var + eps)
    y = cent * (g_ref[...] * inv) + bt_ref[...]
    o_ref[...] = jnp.where(y >= 0, y, slope * y)


def _deconv_conv_kernel(w_sm, b_sm, x_ref, y_ref, psum_ref, psq_ref, *,
                        K, Cin, Cout, Td, Ho, Wo):
    """ConvTranspose3d (stride 1) for one (batch, D-block) tile.

    x_ref   : (1, Cin, Dpad, Hpad, Wpad) bf16, whole padded volume of this batch
              element (resident in VMEM across the D-block grid axis).
    y_ref   : (1, Cout, Td, Ho, Wo) f32, pre-BN output block (bias included).
    psum/psq: (1, 1, Cout, Ho, Wo) f32, per-block partial BN sums (single pass
              over y while it is still in VMEM)."""
    doff = pl.program_id(1) * Td

    # initialize with the conv bias
    for co in range(Cout):
        y_ref[0, co] = jnp.zeros((Td, Ho, Wo), jnp.float32) + b_sm[co]

    def tap_body(kd, carry):
        for co in range(Cout):
            acc = None
            for kh in range(K):
                for kw in range(K):
                    for ci in range(Cin):
                        w = w_sm[(((kd * K + kh) * K + kw) * Cin + ci) * Cout + co]
                        xs = x_ref[0, ci, pl.ds(doff + kd, Td),
                                   kh:kh + Ho, kw:kw + Wo]
                        t = xs * w                       # bf16 * f32 -> f32
                        acc = t if acc is None else acc + t
            y_ref[0, co] += acc
        return carry

    jax.lax.fori_loop(0, K, tap_body, 0)

    # partial BN statistics (reduce only over the leading, untiled D axis here;
    # the remaining tiny reduction happens in JAX)
    for co in range(Cout):
        yc = y_ref[0, co]
        psum_ref[0, 0, co] = jnp.sum(yc, axis=0)
        psq_ref[0, 0, co] = jnp.sum(yc * yc, axis=0)


def _bn_act_kernel(scale_sm, shift_sm, y_ref, o_ref, *, Cout, slope):
    for co in range(Cout):
        v = y_ref[0, co] * scale_sm[co] + shift_sm[co]
        if slope == 0.0:
            v = jnp.maximum(v, 0.0)
        elif slope != 1.0:
            v = jnp.where(v >= 0, v, slope * v)
        o_ref[0, co] = v


# --------------------------------------------------------------------------- #
# Wrappers
# --------------------------------------------------------------------------- #
def fc_act(x, layer, slope):
    M, _ = x.shape
    N = layer["w"].shape[1]
    Mp = _round_up(M, 8)
    xp = jnp.pad(x, ((0, Mp - M), (0, 0))) if Mp != M else x
    out = pl.pallas_call(
        functools.partial(_fc_act_kernel, slope=slope),
        out_shape=jax.ShapeDtypeStruct((Mp, N), jnp.float32),
        compiler_params=pltpu.CompilerParams(vmem_limit_bytes=_VMEM_LIMIT),
    )(xp.astype(jnp.float32),
      layer["w"].astype(jnp.float32),
      layer["b"].reshape(1, N).astype(jnp.float32))
    return out[:M]


def _extract_patches_convtranspose(x, K, S):
    """im2col of the stride-1 equivalent conv of ConvTranspose3d (small layers
    only; the big layers never build this matrix)."""
    N, D, H, W, C = x.shape
    if S > 1:
        # TODO(synk): sub-pixel decomposition would skip the zero taps; layer is tiny.
        Dd, Hd, Wd = (D - 1) * S + 1, (H - 1) * S + 1, (W - 1) * S + 1
        xd = jnp.zeros((N, Dd, Hd, Wd, C), x.dtype).at[:, ::S, ::S, ::S, :].set(x)
    else:
        xd = x
    p = K - 1
    xp = jnp.pad(xd, ((0, 0), (p, p), (p, p), (p, p), (0, 0)))
    Dp, Hp, Wp = xp.shape[1], xp.shape[2], xp.shape[3]
    Do, Ho, Wo = Dp - K + 1, Hp - K + 1, Wp - K + 1
    slabs = []
    for kd in range(K):
        for kh in range(K):
            for kw in range(K):
                slabs.append(xp[:, kd:kd + Do, kh:kh + Ho, kw:kw + Wo, :])
    a = jnp.stack(slabs, axis=4)                    # (N, Do, Ho, Wo, K^3, C)
    return a.reshape(N * Do * Ho * Wo, (K ** 3) * C), (Do, Ho, Wo)


def _convtranspose_weight_matrix(w_t):
    """(Cin, Cout, K, K, K) -> (K^3*Cin, Cout), spatially flipped."""
    cout = w_t.shape[1]
    wf = w_t[:, :, ::-1, ::-1, ::-1]
    return jnp.transpose(wf, (2, 3, 4, 0, 1)).reshape(-1, cout)


def deconv_bn_act_small(x, layer, slope, eps=1e-5):
    """deconv1..4 (spatial <= 12^3): fused single-step kernel, NDHWC in/out."""
    B = x.shape[0]
    K, S = layer["kernel"], layer["stride"]
    Cout = layer["w"].shape[1]
    a, (Do, Ho, Wo) = _extract_patches_convtranspose(x, K, S)
    M = a.shape[0]
    Mp = _round_up(M, 8)
    if Mp != M:
        a = jnp.pad(a, ((0, Mp - M), (0, 0)))
    a = a.astype(jnp.bfloat16)
    wmat = _convtranspose_weight_matrix(layer["w"]).astype(jnp.bfloat16)
    bias = layer["b"].reshape(1, Cout).astype(jnp.float32)
    gamma = layer["gamma"].reshape(1, Cout).astype(jnp.float32)
    beta = layer["beta"].reshape(1, Cout).astype(jnp.float32)
    out = pl.pallas_call(
        functools.partial(_deconv_small_kernel, M=M, slope=slope, eps=eps),
        out_shape=jax.ShapeDtypeStruct((Mp, Cout), jnp.float32),
        compiler_params=pltpu.CompilerParams(vmem_limit_bytes=_VMEM_LIMIT),
    )(a, wmat, bias, gamma, beta)
    return out[:M].reshape(B, Do, Ho, Wo, Cout)


def _pick_td(Do, per_td_cost, budget):
    best = 1
    for td in range(1, Do + 1):
        if Do % td == 0 and td * per_td_cost <= budget:
            best = td
    return best


def deconv_bn_act_big(x, layer, slope, eps=1e-5):
    """deconv5..7: in-VMEM tap-accumulation conv + fused partial BN stats, then
    a BN-apply + activation pass.  Layout (B, C, D, H, W), W on lanes."""
    B, Cin, Din, Hin, Win = x.shape
    K = layer["kernel"]
    assert layer["stride"] == 1
    Cout = layer["w"].shape[1]
    Do, Ho, Wo = Din + K - 1, Hin + K - 1, Win + K - 1
    p = K - 1
    xpad = jnp.pad(x, ((0, 0), (0, 0), (p, p), (p, p), (p, p))).astype(jnp.bfloat16)
    Dp, Hp, Wp = Din + 2 * p, Hin + 2 * p, Win + 2 * p

    wf = layer["w"][:, :, ::-1, ::-1, ::-1]                     # flip taps
    w_flat = jnp.transpose(wf, (2, 3, 4, 0, 1)).reshape(-1).astype(jnp.float32)
    bias = layer["b"].astype(jnp.float32)

    # D-block size: keep the unrolled kernel body small (compile + interpret safe)
    per_td = Cout * K * K * Cin * _cdiv(Ho, 8) * max(1, _cdiv(Wo, 128)) * 4
    Td = _pick_td(Do, per_td, 20000)
    nD = Do // Td

    conv = pl.pallas_call(
        functools.partial(_deconv_conv_kernel, K=K, Cin=Cin, Cout=Cout,
                          Td=Td, Ho=Ho, Wo=Wo),
        grid=(B, nD),
        in_specs=[
            pl.BlockSpec(memory_space=pltpu.MemorySpace.SMEM),                 # weights
            pl.BlockSpec(memory_space=pltpu.MemorySpace.SMEM),                 # bias
            pl.BlockSpec((1, Cin, Dp, Hp, Wp), lambda n, d: (n, 0, 0, 0, 0)),  # resident
        ],
        out_specs=(
            pl.BlockSpec((1, Cout, Td, Ho, Wo), lambda n, d: (n, 0, d, 0, 0)),
            pl.BlockSpec((1, 1, Cout, Ho, Wo), lambda n, d: (n, d, 0, 0, 0)),
            pl.BlockSpec((1, 1, Cout, Ho, Wo), lambda n, d: (n, d, 0, 0, 0)),
        ),
        out_shape=(
            jax.ShapeDtypeStruct((B, Cout, Do, Ho, Wo), jnp.float32),
            jax.ShapeDtypeStruct((B, nD, Cout, Ho, Wo), jnp.float32),
            jax.ShapeDtypeStruct((B, nD, Cout, Ho, Wo), jnp.float32),
        ),
        compiler_params=pltpu.CompilerParams(
            dimension_semantics=("parallel", "arbitrary"),
            vmem_limit_bytes=_VMEM_LIMIT),
    )(w_flat, bias, xpad)
    y, psum, psq = conv

    cnt = float(B * Do * Ho * Wo)
    ssum = jnp.sum(psum, axis=(0, 1, 3, 4))                     # (Cout,)
    ssq = jnp.sum(psq, axis=(0, 1, 3, 4))
    mean = ssum / cnt
    var = jnp.maximum(ssq / cnt - mean * mean, 0.0)             # clamp (review note)
    inv = layer["gamma"] / jnp.sqrt(var + eps)
    scale = inv.astype(jnp.float32)
    shift = (layer["beta"] - mean * inv).astype(jnp.float32)

    # elementwise BN-apply + activation; whole D range per step (cheap body)
    out = pl.pallas_call(
        functools.partial(_bn_act_kernel, Cout=Cout, slope=slope),
        grid=(B, 1),
        in_specs=[
            pl.BlockSpec(memory_space=pltpu.MemorySpace.SMEM),
            pl.BlockSpec(memory_space=pltpu.MemorySpace.SMEM),
            pl.BlockSpec((1, Cout, Do, Ho, Wo), lambda n, d: (n, 0, 0, 0, 0)),
        ],
        out_specs=pl.BlockSpec((1, Cout, Do, Ho, Wo), lambda n, d: (n, 0, 0, 0, 0)),
        out_shape=jax.ShapeDtypeStruct((B, Cout, Do, Ho, Wo), jnp.float32),
        compiler_params=pltpu.CompilerParams(
            dimension_semantics=("parallel", "arbitrary"),
            vmem_limit_bytes=_VMEM_LIMIT),
    )(scale, shift, y)
    return out


def _upsample_nearest2(x):
    """nn.Upsample(scale_factor=2, mode='nearest') on (B, C, D, H, W), one pass."""
    B, C, D, H, W = x.shape
    x = jnp.broadcast_to(x[:, :, :, None, :, None, :, None],
                         (B, C, D, 2, H, 2, W, 2))
    return x.reshape(B, C, 2 * D, 2 * H, 2 * W)


# --------------------------------------------------------------------------- #
# Decoder forward
# --------------------------------------------------------------------------- #
def decoder_forward(params, x, cfg):
    slope = cfg["leakyrelu_const"]
    E = cfg["embedded_cube_edge"]
    C0 = cfg["deconv_input_channels"]
    B = x.shape[0]

    out = fc_act(x, params["fc1"], slope)
    out = fc_act(out, params["fc2"], slope)
    out = fc_act(out, params["fc3"], slope)

    # TODO(synk): the reference forward does `view(batch, 1, E, E, E)`, which is
    # shape-inconsistent with fc3 (E^3*C0 features) and deconv1 (C0 in-channels);
    # we use the consistent (B, C0, E, E, E) interpretation.
    out = out.reshape(B, C0, E, E, E)
    out = jnp.transpose(out, (0, 2, 3, 4, 1))        # NDHWC for the small path

    for i in (1, 2, 3, 4):
        out = deconv_bn_act_small(out, params["deconv%d" % i], slope)

    out = jnp.transpose(out, (0, 4, 1, 2, 3))        # NCDHW for the big path
    for i in (5, 6, 7):
        out = _upsample_nearest2(out)                # unpool1/2/3
        act_slope = slope if i < 7 else 0.0          # layer 7 uses ReLU
        out = deconv_bn_act_big(out, params["deconv%d" % i], act_slope)
    return out                                        # (B, 1, 112, 112, 112)


def init_params(key, cfg):
    E = cfg["embedded_cube_edge"]
    emb, h1, h2 = cfg["embedding_dim"], cfg["fc1_hidden_dim"], cfg["fc2_output_dim"]
    C0 = cfg["deconv_input_channels"]
    fc3_out = E ** 3 * C0
    keys = jax.random.split(key, 10)

    def linear(k, din, dout):
        k1, k2 = jax.random.split(k)
        lim = 1.0 / math.sqrt(din)
        return {"w": jax.random.uniform(k1, (din, dout), jnp.float32, -lim, lim),
                "b": jax.random.uniform(k2, (dout,), jnp.float32, -lim, lim)}

    params = {
        "fc1": linear(keys[0], emb, h1),
        "fc2": linear(keys[1], h1, h2),
        "fc3": linear(keys[2], h2, fc3_out),
    }
    deconv_cfg = [(C0, C0 // 2, 2, 1), (C0 // 2, C0 // 4, 2, 1),
                  (C0 // 4, C0 // 8, 3, 1), (C0 // 8, C0 // 16, 4, 2),
                  (C0 // 16, C0 // 32, 3, 1), (C0 // 32, C0 // 64, 4, 1),
                  (C0 // 64, C0 // 128, 3, 1)]
    for idx, (cin, cout, K, S) in enumerate(deconv_cfg, start=1):
        k1, k2 = jax.random.split(keys[2 + idx])
        fan_in, fan_out = cin * K ** 3, cout * K ** 3
        xlim = math.sqrt(6.0 / (fan_in + fan_out))      # xavier_uniform_
        blim = 1.0 / math.sqrt(fan_in)                  # default conv bias init
        params["deconv%d" % idx] = {
            "w": jax.random.uniform(k1, (cin, cout, K, K, K), jnp.float32, -xlim, xlim),
            "b": jax.random.uniform(k2, (cout,), jnp.float32, -blim, blim),
            "gamma": jnp.ones((cout,), jnp.float32),
            "beta": jnp.zeros((cout,), jnp.float32),
            "kernel": K, "stride": S,
        }
    return params


if __name__ == "__main__":
    cfg = dict(embedded_cube_edge=1,
               fc1_hidden_dim=64,
               fc2_output_dim=64,
               embedding_dim=32,
               leakyrelu_const=0.2,
               deconv_input_channels=128)   # 7 halvings -> final 1 channel

    key = jax.random.PRNGKey(0)
    pkey, xkey = jax.random.split(key)
    params = init_params(pkey, cfg)
    x = jax.random.normal(xkey, (2, cfg["embedding_dim"]), jnp.float32)

    out = decoder_forward(params, x, cfg)
    out = jax.block_until_ready(out)

    # spatial chain: 1->2->3->5->12 ->(x2)24->26 ->(x2)52->55 ->(x2)110->112
    assert out.shape == (2, 1, 112, 112, 112), out.shape
    assert bool(jnp.isfinite(out).all())
    print("KERNEL_OK")
</pallas_src>

<mosaic_0001>
module attributes {stable_mosaic.version = 11 : i64} {
  func.func @_fc_act_kernel(%arg0: memref<8x32xf32, #tpu.memory_space<vmem>>, %arg1: memref<32x64xf32, #tpu.memory_space<vmem>>, %arg2: memref<1x64xf32, #tpu.memory_space<vmem>>, %arg3: memref<8x64xf32, #tpu.memory_space<vmem>>) attributes {dimension_semantics = [], scalar_prefetch = 0 : i64, scratch_operands = 0 : i64, tpu.core_type = #tpu.core_type<tc>} {
    %c0 = arith.constant 0 : index
    %c0_0 = arith.constant 0 : index
    %0 = vector.load %arg0[%c0, %c0_0] : memref<8x32xf32, #tpu.memory_space<vmem>>, vector<8x32xf32>
    %c0_1 = arith.constant 0 : index
    %c0_2 = arith.constant 0 : index
    %1 = vector.load %arg1[%c0_1, %c0_2] : memref<32x64xf32, #tpu.memory_space<vmem>>, vector<32x64xf32>
    %cst = arith.constant dense<0.000000e+00> : vector<8x64xf32>
    %2 = tpu.matmul %0, %1, %cst {dimension_numbers = #tpu.dot_dimension_numbers<[1], [0], [0], [1], [0, 0, 1, 1], [], []>} : vector<8x32xf32>, vector<32x64xf32>, vector<8x64xf32> -> vector<8x64xf32>
    %c0_3 = arith.constant 0 : index
    %c0_4 = arith.constant 0 : index
    %3 = vector.load %arg2[%c0_3, %c0_4] : memref<1x64xf32, #tpu.memory_space<vmem>>, vector<1x64xf32>
    %4 = vector.broadcast %3 : vector<1x64xf32> to vector<8x64xf32>
    %5 = arith.addf %2, %4 : vector<8x64xf32>
    %cst_5 = arith.constant 0.000000e+00 : f32
    %6 = vector.broadcast %cst_5 : f32 to vector<8x64xf32>
    %7 = arith.cmpf oge, %5, %6 : vector<8x64xf32>
    %cst_6 = arith.constant 2.000000e-01 : f32
    %8 = vector.broadcast %cst_6 : f32 to vector<8x64xf32>
    %9 = arith.mulf %8, %5 : vector<8x64xf32>
    %10 = arith.select %7, %5, %9 : vector<8x64xi1>, vector<8x64xf32>
    %c0_7 = arith.constant 0 : index
    %c0_8 = arith.constant 0 : index
    %11 = vector.load %arg3[%c0_7, %c0_8] : memref<8x64xf32, #tpu.memory_space<vmem>>, vector<8x64xf32>
    tpu.vector_store %arg3[%c0_7, %c0_8], %10 {strides = array<i32>} : memref<8x64xf32, #tpu.memory_space<vmem>>, vector<8x64xf32>,
    return
  }
}

</mosaic_0001>

<llo_original>
// kernel: tpu_custom_call.1
$region0: #{tpu_custom_call.1}
  #allocation0 [shape = 'u32[]', space=smem, size = 0x4, offset = 0x4, fixed_abs, tag = 'smem constant byte address 0x4 - core index']
  #allocation1 [shape = 'u32[144,128]{1,0:T(1,128)}', space=vmem, size = 0x12000, scoped, tag = 'internal scratch']
  %s0 = inlined_call_operand.hbm [shape: f32[8,32], index: 0, kind: input, shape index: {}]
  %s1 = inlined_call_operand.hbm [shape: f32[32,64], index: 1, kind: input, shape index: {}]
  %s2 = inlined_call_operand.vmem [shape: f32[1,64], index: 2, kind: input, shape index: {}]
  %s3 = inlined_call_operand.hbm [shape: f32[8,64], index: 3, kind: output, shape index: {}]
  %s4 = sld [smem:[#allocation0]]
  $region30: #{tpu_custom_call.1} parent=0
    _
  %s6 = ssub.s32 1, %s4
  %s7 = scalar_select 0, %s6, %s4
  $region1: #{tpu_custom_call.1} parent=0
    #allocation2 [shape = 'u8[4096]{0}', space=vmem, size = 0x1000, scoped, tag = 'input window, operand 0, single buffered']
    #allocation3 [shape = 's32[1]{0}', space=sflag, size = 0x4, scoped, tag = 'scoped memory for tpu_custom_call.1']
    #allocation4 [shape = 's32[1]{0}', space=sflag, size = 0x4, scoped, tag = 'scoped memory for tpu_custom_call.1']
    #allocation5 [shape = 'u8[16384]{0}', space=vmem, size = 0x4000, scoped, tag = 'input window, operand 1, single buffered']
    #allocation6 [shape = 's32[1]{0}', space=sflag, size = 0x4, scoped, tag = 'scoped memory for tpu_custom_call.1']
    #allocation7 [shape = 'u8[4096]{0}', space=vmem, size = 0x1000, scoped, tag = 'output window, operand 0, single buffered']
    %8 = vsyncpa [#allocation3], 0
    %9 = vsyncpa [#allocation6], 0
    %10 = vsyncpa [#allocation4], 0
    // Predicated region
    $region2: #{tpu_custom_call.1} parent=1 // pred_check
      _
    $region3: #{tpu_custom_call.1} parent=1 // pred_check_branch
      %12 = sbr.rel (0) target = $region5
    $region4: #{tpu_custom_call.1} parent=1 // pred_region
      %s14 = ssub.s32 128, 128
      %15 = vsyncadd [#allocation3], %s14
      %s17 = sshll.u32 [#allocation2], 4
      %s18 = int_to_ptr.vmem [resolvable:$true] %s17
      %20 = dma.hbm_to_vmem [thread:$0]  %s0, 128, %s18, [#allocation3]
    $region5: #{tpu_custom_call.1} parent=1 // pred_fallthru
      _
    // Predicated region
    $region6: #{tpu_custom_call.1} parent=1 // pred_check
      _
    $region7: #{tpu_custom_call.1} parent=1 // pred_check_branch
      %22 = sbr.rel (0) target = $region9
    $region8: #{tpu_custom_call.1} parent=1 // pred_region
      %s24 = ssub.s32 512, 512
      %25 = vsyncadd [#allocation6], %s24
      %s26 = sshll.u32 [#allocation5], 4
      %s27 = int_to_ptr.vmem [resolvable:$true] %s26
      %32 = dma.hbm_to_vmem [thread:$0]  %s1, 512, %s27, [#allocation6], 128, 128, 8
    $region9: #{tpu_custom_call.1} parent=1 // pred_fallthru
      _
    // Predicated region
    $region10: #{tpu_custom_call.1} parent=1 // pred_check
      _
    $region11: #{tpu_custom_call.1} parent=1 // pred_check_branch
      %34 = sbr.rel (0) target = $region13
    $region12: #{tpu_custom_call.1} parent=1 // pred_region
      _
    $region13: #{tpu_custom_call.1} parent=1 // pred_fallthru
      _
    // Predicated region
    $region14: #{tpu_custom_call.1} parent=1 // pred_check
      _
    $region15: #{tpu_custom_call.1} parent=1 // pred_check_branch
      %36 = sbr.rel (0) target = $region17
    $region16: #{tpu_custom_call.1} parent=1 // pred_region
      %37 = dma.done [#allocation3], 128
    $region17: #{tpu_custom_call.1} parent=1 // pred_fallthru
      _
    // Predicated region
    $region18: #{tpu_custom_call.1} parent=1 // pred_check
      _
    $region19: #{tpu_custom_call.1} parent=1 // pred_check_branch
      %39 = sbr.rel (0) target = $region21
    $region20: #{tpu_custom_call.1} parent=1 // pred_region
      %40 = dma.done [#allocation6], 512
    $region21: #{tpu_custom_call.1} parent=1 // pred_fallthru
      _
    %v41 = vld [vmem:[#allocation2] sm:$0xff]
    %v42 = vld [vmem:[#allocation5] sm:$0xff]
    %v43 = vld [vmem:[#allocation5 + $0x8] sm:$0xff]
    %v44 = vld [vmem:[#allocation5 + $0x10] sm:$0xff]
    %v45 = vld [vmem:[#allocation5 + $0x18] sm:$0xff]
    %v46 = vld [vmem:[%s2] sm:$0x1]
    %v48 = vlaneseq
    %v49 = vshrl.u32 %v48, 7
    %v50 = vsub.s32 0, %v49
    %v51 = vrot.slane %v46, %v50
    %vm53 = vcmask 261120
    %v55 = vsel %vm53, %v41, 0
    %57 = vmatprep.subr.mxu0 0.0
    %58 = vmatpush1.msra.mxu0 %v42
    %59 = vmatprep.subr.mxu0 0.0
    %60 = vmatpush1.msra.mxu0 %v43
    %61 = vmatprep.subr.mxu0 0.0
    %62 = vmatpush1.msra.mxu0 %v44
    %63 = vmatprep.subr.mxu0 0.0
    %64 = vmatpush1.msra.mxu0 %v45
    %65 = vmatprep.subr.mxu0 0.0
    %66 = vmatpush1.msra.mxu0 0.0
    %67 = vmatprep.subr.mxu0 0.0
    %68 = vmatpush1.msra.mxu0 0.0
    %69 = vmatprep.subr.mxu0 0.0
    %70 = vmatpush1.msra.mxu0 0.0
    %71 = vmatprep.subr.mxu0 0.0
    %72 = vmatpush1.msra.mxu0 0.0
    %73 = vmatprep.subr.mxu0 0.0
    %74 = vmatpush1.msra.mxu0 0.0
    %75 = vmatprep.subr.mxu0 0.0
    %76 = vmatpush1.msra.mxu0 0.0
    %77 = vmatprep.subr.mxu0 0.0
    %78 = vmatpush1.msra.mxu0 0.0
    %79 = vmatprep.subr.mxu0 0.0
    %80 = vmatpush1.msra.mxu0 0.0
    %81 = vmatprep.subr.mxu0 0.0
    %82 = vmatpush1.msra.mxu0 0.0
    %83 = vmatprep.subr.mxu0 0.0
    %84 = vmatpush1.msra.mxu0 0.0
    %85 = vmatprep.subr.mxu0 0.0
    %86 = vmatpush1.msra.mxu0 0.0
    %87 = vmatprep.subr.mxu0 0.0
    %88 = vmatpush1.msra.mxu0 0.0
    %89 = vmatprep.subr.mxu0 0.0
    %90 = vmatpush1.msra.mxu0 0.0
    %91 = vmatprep.subr.mxu0 0.0
    %92 = vmatpush1.msra.mxu0 0.0
    %93 = vmatprep.subr.mxu0 0.0
    %94 = vmatpush1.msra.mxu0 0.0
    %95 = vmatprep.subr.mxu0 0.0
    %96 = vmatpush1.msra.mxu0 0.0
    %97 = vmatprep.subr.mxu0 0.0
    %98 = vmatpush1.msra.mxu0 0.0
    %99 = vmatprep.subr.mxu0 0.0
    %100 = vmatpush1.msra.mxu0 0.0
    %101 = vmatprep.subr.mxu0 0.0
    %102 = vmatpush1.msra.mxu0 0.0
    %103 = vmatprep.subr.mxu0 0.0
    %104 = vmatpush1.msra.mxu0 0.0
    %105 = vmatprep.subr.mxu0 0.0
    %106 = vmatpush1.msra.mxu0 0.0
    %107 = vmatprep.subr.mxu0 0.0
    %108 = vmatpush1.msra.mxu0 0.0
    %109 = vmatprep.subr.mxu0 0.0
    %110 = vmatpush1.msra.mxu0 0.0
    %111 = vmatprep.subr.mxu0 0.0
    %112 = vmatpush1.msra.mxu0 0.0
    %113 = vmatprep.subr.mxu0 0.0
    %114 = vmatpush1.msra.mxu0 0.0
    %115 = vmatprep.subr.mxu0 0.0
    %116 = vmatpush1.msra.mxu0 0.0
    %117 = vmatprep.subr.mxu0 0.0
    %118 = vmatpush1.msra.mxu0 0.0
    %119 = vmatprep.subr.mxu0 0.0
    %120 = vmatpush1.msra.mxu0 0.0
    %121 = vmatprep.mubr.f32.mxu0 0.0
    %122 = vmatmul.mubr.f32.gmra.mrb[0].mxu0 %v55
    %v123 = vpop.f32.mrb[0].mxu0
    %v124 = vadd.f32 %v51, %v123
    %v125 = vpop.f32.mrb[0].mxu0
    %126 = vdwg.mxu0
    %vm127 = vcmp.ge.f32.partialorder %v124, 0.0
    %v128 = vmul.f32 %v124, 0.2
    %v129 = vsel %vm127, %v124, %v128
    %vm130 = vcmask 523264
    %131 = vst.msk [vmem:[#allocation7] sm:$0xff] %vm130, %v129
    // Predicated region
    $region22: #{tpu_custom_call.1} parent=1 // pred_check
      _
    $region23: #{tpu_custom_call.1} parent=1 // pred_check_branch
      %133 = sbr.rel (0) target = $region25
    $region24: #{tpu_custom_call.1} parent=1 // pred_region
      %s135 = ssub.s32 128, 128
      %136 = vsyncadd [#allocation4], %s135
      %s138 = sshll.u32 [#allocation7], 4
      %s139 = int_to_ptr.vmem [resolvable:$true] %s138
      %141 = dma.vmem_to_hbm [thread:$0]  %s139, 128, %s3, [#allocation4]
    $region25: #{tpu_custom_call.1} parent=1 // pred_fallthru
      _
    // Predicated region
    $region26: #{tpu_custom_call.1} parent=1 // pred_check
      _
    $region27: #{tpu_custom_call.1} parent=1 // pred_check_branch
      %143 = sbr.rel (0) target = $region29
    $region28: #{tpu_custom_call.1} parent=1 // pred_region
      %144 = dma.done [#allocation4], 128
    $region29: #{tpu_custom_call.1} parent=1 // pred_fallthru
      _
    %145 = vsyncpa [#allocation3], 1
    %146 = vsyncpa [#allocation6], 1
    %147 = vsyncpa [#allocation4], 1

</llo_original>
